<compile_context>
chip_gen: v6e
topology: v6e:2x2x1
jax: 0.10.0
libtpu: 0.0.40
codegen_flags: <defaults>
</compile_context>

<pallas_src>
from functools import partial

import jax
import jax.numpy as jnp
import numpy as np
from jax.experimental import pallas as pl
from jax.experimental.pallas import tpu as pltpu

# Large finite negative for the causal mask: safe even for fully-masked rows.
_MASK_VALUE = -1e30


def fused_mha_kernel(x_ref, wqkv_ref, wp_ref, bp_ref, o_ref, *, n_heads, head_size):
    T = x_ref.shape[1]
    H = n_heads * head_size

    x = x_ref[0]                 # (T, C)
    wqkv = wqkv_ref[...]         # (C, 3*H): [Q heads | K heads | V heads]; Q pre-scaled
    wp = wp_ref[...]             # (H, C)
    bias = bp_ref[...]           # (1, C)

    # One wide MXU matmul produces (already scaled) Q, K, V for every head.
    qkv = jnp.dot(x, wqkv, preferred_element_type=jnp.float32)        # (T, 3*H)

    row = jax.lax.broadcasted_iota(jnp.int32, (T, T), 0)
    col = jax.lax.broadcasted_iota(jnp.int32, (T, T), 1)
    causal = col <= row

    # Per-head causal softmax attention.  head_size is tiny here, so the static
    # lane slices below are cheap and paid once per head; see scaling TODOs above.
    head_outs = []
    for h in range(n_heads):
        lo = h * head_size
        q = qkv[:, lo:lo + head_size]                                  # (T, hs), pre-scaled
        k = qkv[:, H + lo:H + lo + head_size]                          # (T, hs)
        v = qkv[:, 2 * H + lo:2 * H + lo + head_size]                  # (T, hs)

        # q @ k^T with the transpose folded into the matmul (no XLU vxpose).
        s = jax.lax.dot_general(q, k, (((1,), (1,)), ((), ())),
                                preferred_element_type=jnp.float32)    # (T, T)
        s = jnp.where(causal, s, _MASK_VALUE)
        m = jnp.max(s, axis=-1, keepdims=True)
        p = jnp.exp(s - m)
        denom = jnp.sum(p, axis=-1, keepdims=True)
        p = p * (1.0 / denom)            # exact reciprocal on (T,1) only, then broadcast

        head_outs.append(jnp.dot(p, v, preferred_element_type=jnp.float32))  # (T, hs)

    # "Concat" of heads + ONE full-depth (T,H)@(H,C) projection matmul.
    cat = jnp.concatenate(head_outs, axis=-1)                          # (T, H)
    out = jnp.dot(cat, wp, preferred_element_type=jnp.float32) + bias  # (T, C)
    o_ref[0] = out.astype(o_ref.dtype)


def pack_mha_params(wq, wk, wv, w_proj, b_proj):
    """One-time parameter preparation (run once, NOT in the per-step forward).

    wq/wk/wv: (n_heads, C, head_size) per-head weights (x @ W layout).
    Returns:
      wqkv : (C, 3*H), head-major columns [Q heads | K heads | V heads], with
             the 1/sqrt(head_size) attention scale folded into the Q columns.
      wp   : (H, C) output projection weight (x @ W layout).
      bp   : (1, C) output projection bias.
    """
    n_heads, C, head_size = wq.shape
    H = n_heads * head_size
    scale = 1.0 / (head_size ** 0.5)
    wqkv = jnp.concatenate(
        [
            jnp.transpose(wq * scale, (1, 0, 2)).reshape(C, H),
            jnp.transpose(wk, (1, 0, 2)).reshape(C, H),
            jnp.transpose(wv, (1, 0, 2)).reshape(C, H),
        ],
        axis=-1,
    )
    return wqkv, w_proj, jnp.reshape(b_proj, (1, C))


def multi_head_attention(x, wqkv, w_proj, b_proj2d, *, n_heads, head_size):
    """x: (B, T, C); wqkv: (C, 3H); w_proj: (H, C); b_proj2d: (1, C)."""
    B, T, C = x.shape
    H = n_heads * head_size

    flops = (2 * B * T * C * 3 * H                     # fused QKV matmul
             + 4 * B * n_heads * T * T * head_size     # scores + attn @ V
             + 2 * B * T * H * C)                      # output projection
    transcendentals = B * n_heads * T * T              # exp
    bytes_accessed = 4 * (x.size + wqkv.size + w_proj.size + C + B * T * C)

    return pl.pallas_call(
        partial(fused_mha_kernel, n_heads=n_heads, head_size=head_size),
        out_shape=jax.ShapeDtypeStruct((B, T, C), x.dtype),
        grid=(B,),
        in_specs=[
            pl.BlockSpec((1, T, C), lambda b: (b, 0, 0)),       # x: one batch row/step
            pl.BlockSpec((C, 3 * H), lambda b: (0, 0)),         # weights: grid-invariant,
            pl.BlockSpec((H, C), lambda b: (0, 0)),             #   DMA'd once, resident
            pl.BlockSpec((1, C), lambda b: (0, 0)),
        ],
        out_specs=pl.BlockSpec((1, T, C), lambda b: (b, 0, 0)),  # lane-dense (B, T, C)
        compiler_params=pltpu.CompilerParams(
            dimension_semantics=("parallel",)),
        cost_estimate=pl.CostEstimate(
            flops=flops,
            transcendentals=transcendentals,
            bytes_accessed=bytes_accessed),
    )(x, wqkv, w_proj, b_proj2d)


def reference(x, wq, wk, wv, w_proj, b_proj):
    """Pure-JAX mirror of the PyTorch forward (dropout=None)."""
    n_heads, _, head_size = wq.shape
    T = x.shape[1]
    mask = jnp.tril(jnp.ones((T, T), dtype=bool))
    outs = []
    for h in range(n_heads):
        q = x @ wq[h]
        k = x @ wk[h]
        v = x @ wv[h]
        s = (q @ jnp.swapaxes(k, -1, -2)) / (head_size ** 0.5)
        s = jnp.where(mask, s, -jnp.inf)
        p = jax.nn.softmax(s, axis=-1)
        outs.append(p @ v)
    cat = jnp.concatenate(outs, axis=-1)
    return cat @ w_proj + b_proj


if __name__ == "__main__":
    # module hyper-parameters
    B, T = 2, 8
    n_emb, n_heads, head_size, block_size = 32, 4, 8, 8
    H = n_heads * head_size

    key = jax.random.PRNGKey(0)
    kx, kq, kk, kv, kp, kb = jax.random.split(key, 6)

    x = jax.random.normal(kx, (B, T, n_emb), dtype=jnp.float32)
    # deterministic synthetic weights (nn.Linear weight is (out,in); stored here as W.T)
    wq = 0.05 * jax.random.normal(kq, (n_heads, n_emb, head_size), dtype=jnp.float32)
    wk = 0.05 * jax.random.normal(kk, (n_heads, n_emb, head_size), dtype=jnp.float32)
    wv = 0.05 * jax.random.normal(kv, (n_heads, n_emb, head_size), dtype=jnp.float32)
    w_proj = 0.05 * jax.random.normal(kp, (H, n_emb), dtype=jnp.float32)
    b_proj = 0.05 * jax.random.normal(kb, (n_emb,), dtype=jnp.float32)

    # One-time parameter packing (kept out of the forward path).
    wqkv, wp, bp = pack_mha_params(wq, wk, wv, w_proj, b_proj)
    wqkv, wp, bp = jax.block_until_ready((wqkv, wp, bp))

    out = multi_head_attention(x, wqkv, wp, bp, n_heads=n_heads, head_size=head_size)
    out = jax.block_until_ready(out)

    ref = reference(x, wq, wk, wv, w_proj, b_proj)
    np.testing.assert_allclose(np.asarray(out), np.asarray(ref), rtol=2e-3, atol=2e-5)
    assert out.shape == (B, T, n_emb)

    print("KERNEL_OK")
</pallas_src>

<mosaic_0001>
module attributes {stable_mosaic.version = 11 : i64} {
  func.func @fused_mha_kernel(%arg0: i32, %arg1: memref<1x8x32xf32, #tpu.memory_space<vmem>>, %arg2: memref<32x96xf32, #tpu.memory_space<vmem>>, %arg3: memref<32x32xf32, #tpu.memory_space<vmem>>, %arg4: memref<1x32xf32, #tpu.memory_space<vmem>>, %arg5: memref<1x8x32xf32, #tpu.memory_space<vmem>>) attributes {dimension_semantics = [#tpu.dimension_semantics<parallel>], iteration_bounds = array<i64: 2>, scalar_prefetch = 0 : i64, scratch_operands = 0 : i64, tpu.core_type = #tpu.core_type<tc>, window_params = [{transform_indices = @transform_0, window_bounds = array<i64: 1, 8, 32>}, {pipeline_mode = #tpu.pipeline_mode<synchronous>, transform_indices = @transform_1, window_bounds = array<i64: 32, 96>}, {pipeline_mode = #tpu.pipeline_mode<synchronous>, transform_indices = @transform_2, window_bounds = array<i64: 32, 32>}, {pipeline_mode = #tpu.pipeline_mode<synchronous>, transform_indices = @transform_3, window_bounds = array<i64: 1, 32>}, {transform_indices = @transform_4, window_bounds = array<i64: 1, 8, 32>}]} {
    %c0 = arith.constant 0 : index
    %c0_0 = arith.constant 0 : index
    %c0_1 = arith.constant 0 : index
    %0 = vector.load %arg1[%c0, %c0_0, %c0_1] : memref<1x8x32xf32, #tpu.memory_space<vmem>>, vector<1x8x32xf32>
    %1 = vector.shape_cast %0 : vector<1x8x32xf32> to vector<8x32xf32>
    %c0_2 = arith.constant 0 : index
    %c0_3 = arith.constant 0 : index
    %2 = vector.load %arg2[%c0_2, %c0_3] : memref<32x96xf32, #tpu.memory_space<vmem>>, vector<32x96xf32>
    %c0_4 = arith.constant 0 : index
    %c0_5 = arith.constant 0 : index
    %3 = vector.load %arg3[%c0_4, %c0_5] : memref<32x32xf32, #tpu.memory_space<vmem>>, vector<32x32xf32>
    %c0_6 = arith.constant 0 : index
    %c0_7 = arith.constant 0 : index
    %4 = vector.load %arg4[%c0_6, %c0_7] : memref<1x32xf32, #tpu.memory_space<vmem>>, vector<1x32xf32>
    %cst = arith.constant dense<0.000000e+00> : vector<8x96xf32>
    %5 = tpu.matmul %1, %2, %cst {dimension_numbers = #tpu.dot_dimension_numbers<[1], [0], [0], [1], [0, 0, 1, 1], [], []>} : vector<8x32xf32>, vector<32x96xf32>, vector<8x96xf32> -> vector<8x96xf32>
    %6 = tpu.iota {dimensions = array<i32: 0>} : vector<8x8xi32>
    %7 = tpu.iota {dimensions = array<i32: 1>} : vector<8x8xi32>
    %8 = arith.cmpi sle, %7, %6 : vector<8x8xi32>
    %9 = vector.extract_strided_slice %5 {offsets = [0, 0], sizes = [8, 8], strides = [1, 1]} : vector<8x96xf32> to vector<8x8xf32>
    %10 = vector.extract_strided_slice %5 {offsets = [0, 32], sizes = [8, 8], strides = [1, 1]} : vector<8x96xf32> to vector<8x8xf32>
    %11 = vector.extract_strided_slice %5 {offsets = [0, 64], sizes = [8, 8], strides = [1, 1]} : vector<8x96xf32> to vector<8x8xf32>
    %cst_8 = arith.constant dense<0.000000e+00> : vector<8x8xf32>
    %12 = tpu.matmul %9, %10, %cst_8 {dimension_numbers = #tpu.dot_dimension_numbers<[1], [1], [0], [0], [0, 0, 1, 0], [], []>} : vector<8x8xf32>, vector<8x8xf32>, vector<8x8xf32> -> vector<8x8xf32>
    %cst_9 = arith.constant -1.000000e+30 : f32
    %13 = vector.broadcast %cst_9 : f32 to vector<8x8xf32>
    %14 = arith.select %8, %12, %13 : vector<8x8xi1>, vector<8x8xf32>
    %cst_10 = arith.constant dense<0xFF800000> : vector<8xf32>
    %15 = vector.multi_reduction <maximumf>, %14, %cst_10 [1] : vector<8x8xf32> to vector<8xf32>
    %16 = vector.shape_cast %15 : vector<8xf32> to vector<8x1xf32>
    %17 = vector.broadcast %16 : vector<8x1xf32> to vector<8x8xf32>
    %18 = arith.subf %14, %17 : vector<8x8xf32>
    %19 = math.exp %18 : vector<8x8xf32>
    %cst_11 = arith.constant dense<0.000000e+00> : vector<8xf32>
    %20 = vector.multi_reduction <add>, %19, %cst_11 [1] : vector<8x8xf32> to vector<8xf32>
    %21 = vector.shape_cast %20 : vector<8xf32> to vector<8x1xf32>
    %cst_12 = arith.constant 1.000000e+00 : f32
    %22 = vector.broadcast %cst_12 : f32 to vector<8x1xf32>
    %23 = arith.divf %22, %21 : vector<8x1xf32>
    %24 = vector.broadcast %23 : vector<8x1xf32> to vector<8x8xf32>
    %25 = arith.mulf %19, %24 : vector<8x8xf32>
    %cst_13 = arith.constant dense<0.000000e+00> : vector<8x8xf32>
    %26 = tpu.matmul %25, %11, %cst_13 {dimension_numbers = #tpu.dot_dimension_numbers<[1], [0], [0], [1], [0, 0, 1, 1], [], []>} : vector<8x8xf32>, vector<8x8xf32>, vector<8x8xf32> -> vector<8x8xf32>
    %27 = vector.extract_strided_slice %5 {offsets = [0, 8], sizes = [8, 8], strides = [1, 1]} : vector<8x96xf32> to vector<8x8xf32>
    %28 = vector.extract_strided_slice %5 {offsets = [0, 40], sizes = [8, 8], strides = [1, 1]} : vector<8x96xf32> to vector<8x8xf32>
    %29 = vector.extract_strided_slice %5 {offsets = [0, 72], sizes = [8, 8], strides = [1, 1]} : vector<8x96xf32> to vector<8x8xf32>
    %cst_14 = arith.constant dense<0.000000e+00> : vector<8x8xf32>
    %30 = tpu.matmul %27, %28, %cst_14 {dimension_numbers = #tpu.dot_dimension_numbers<[1], [1], [0], [0], [0, 0, 1, 0], [], []>} : vector<8x8xf32>, vector<8x8xf32>, vector<8x8xf32> -> vector<8x8xf32>
    %cst_15 = arith.constant -1.000000e+30 : f32
    %31 = vector.broadcast %cst_15 : f32 to vector<8x8xf32>
    %32 = arith.select %8, %30, %31 : vector<8x8xi1>, vector<8x8xf32>
    %cst_16 = arith.constant dense<0xFF800000> : vector<8xf32>
    %33 = vector.multi_reduction <maximumf>, %32, %cst_16 [1] : vector<8x8xf32> to vector<8xf32>
    %34 = vector.shape_cast %33 : vector<8xf32> to vector<8x1xf32>
    %35 = vector.broadcast %34 : vector<8x1xf32> to vector<8x8xf32>
    %36 = arith.subf %32, %35 : vector<8x8xf32>
    %37 = math.exp %36 : vector<8x8xf32>
    %cst_17 = arith.constant dense<0.000000e+00> : vector<8xf32>
    %38 = vector.multi_reduction <add>, %37, %cst_17 [1] : vector<8x8xf32> to vector<8xf32>
    %39 = vector.shape_cast %38 : vector<8xf32> to vector<8x1xf32>
    %cst_18 = arith.constant 1.000000e+00 : f32
    %40 = vector.broadcast %cst_18 : f32 to vector<8x1xf32>
    %41 = arith.divf %40, %39 : vector<8x1xf32>
    %42 = vector.broadcast %41 : vector<8x1xf32> to vector<8x8xf32>
    %43 = arith.mulf %37, %42 : vector<8x8xf32>
    %cst_19 = arith.constant dense<0.000000e+00> : vector<8x8xf32>
    %44 = tpu.matmul %43, %29, %cst_19 {dimension_numbers = #tpu.dot_dimension_numbers<[1], [0], [0], [1], [0, 0, 1, 1], [], []>} : vector<8x8xf32>, vector<8x8xf32>, vector<8x8xf32> -> vector<8x8xf32>
    %45 = vector.extract_strided_slice %5 {offsets = [0, 16], sizes = [8, 8], strides = [1, 1]} : vector<8x96xf32> to vector<8x8xf32>
    %46 = vector.extract_strided_slice %5 {offsets = [0, 48], sizes = [8, 8], strides = [1, 1]} : vector<8x96xf32> to vector<8x8xf32>
    %47 = vector.extract_strided_slice %5 {offsets = [0, 80], sizes = [8, 8], strides = [1, 1]} : vector<8x96xf32> to vector<8x8xf32>
    %cst_20 = arith.constant dense<0.000000e+00> : vector<8x8xf32>
    %48 = tpu.matmul %45, %46, %cst_20 {dimension_numbers = #tpu.dot_dimension_numbers<[1], [1], [0], [0], [0, 0, 1, 0], [], []>} : vector<8x8xf32>, vector<8x8xf32>, vector<8x8xf32> -> vector<8x8xf32>
    %cst_21 = arith.constant -1.000000e+30 : f32
    %49 = vector.broadcast %cst_21 : f32 to vector<8x8xf32>
    %50 = arith.select %8, %48, %49 : vector<8x8xi1>, vector<8x8xf32>
    %cst_22 = arith.constant dense<0xFF800000> : vector<8xf32>
    %51 = vector.multi_reduction <maximumf>, %50, %cst_22 [1] : vector<8x8xf32> to vector<8xf32>
    %52 = vector.shape_cast %51 : vector<8xf32> to vector<8x1xf32>
    %53 = vector.broadcast %52 : vector<8x1xf32> to vector<8x8xf32>
    %54 = arith.subf %50, %53 : vector<8x8xf32>
    %55 = math.exp %54 : vector<8x8xf32>
    %cst_23 = arith.constant dense<0.000000e+00> : vector<8xf32>
    %56 = vector.multi_reduction <add>, %55, %cst_23 [1] : vector<8x8xf32> to vector<8xf32>
    %57 = vector.shape_cast %56 : vector<8xf32> to vector<8x1xf32>
    %cst_24 = arith.constant 1.000000e+00 : f32
    %58 = vector.broadcast %cst_24 : f32 to vector<8x1xf32>
    %59 = arith.divf %58, %57 : vector<8x1xf32>
    %60 = vector.broadcast %59 : vector<8x1xf32> to vector<8x8xf32>
    %61 = arith.mulf %55, %60 : vector<8x8xf32>
    %cst_25 = arith.constant dense<0.000000e+00> : vector<8x8xf32>
    %62 = tpu.matmul %61, %47, %cst_25 {dimension_numbers = #tpu.dot_dimension_numbers<[1], [0], [0], [1], [0, 0, 1, 1], [], []>} : vector<8x8xf32>, vector<8x8xf32>, vector<8x8xf32> -> vector<8x8xf32>
    %63 = vector.extract_strided_slice %5 {offsets = [0, 24], sizes = [8, 8], strides = [1, 1]} : vector<8x96xf32> to vector<8x8xf32>
    %64 = vector.extract_strided_slice %5 {offsets = [0, 56], sizes = [8, 8], strides = [1, 1]} : vector<8x96xf32> to vector<8x8xf32>
    %65 = vector.extract_strided_slice %5 {offsets = [0, 88], sizes = [8, 8], strides = [1, 1]} : vector<8x96xf32> to vector<8x8xf32>
    %cst_26 = arith.constant dense<0.000000e+00> : vector<8x8xf32>
    %66 = tpu.matmul %63, %64, %cst_26 {dimension_numbers = #tpu.dot_dimension_numbers<[1], [1], [0], [0], [0, 0, 1, 0], [], []>} : vector<8x8xf32>, vector<8x8xf32>, vector<8x8xf32> -> vector<8x8xf32>
    %cst_27 = arith.constant -1.000000e+30 : f32
    %67 = vector.broadcast %cst_27 : f32 to vector<8x8xf32>
    %68 = arith.select %8, %66, %67 : vector<8x8xi1>, vector<8x8xf32>
    %cst_28 = arith.constant dense<0xFF800000> : vector<8xf32>
    %69 = vector.multi_reduction <maximumf>, %68, %cst_28 [1] : vector<8x8xf32> to vector<8xf32>
    %70 = vector.shape_cast %69 : vector<8xf32> to vector<8x1xf32>
    %71 = vector.broadcast %70 : vector<8x1xf32> to vector<8x8xf32>
    %72 = arith.subf %68, %71 : vector<8x8xf32>
    %73 = math.exp %72 : vector<8x8xf32>
    %cst_29 = arith.constant dense<0.000000e+00> : vector<8xf32>
    %74 = vector.multi_reduction <add>, %73, %cst_29 [1] : vector<8x8xf32> to vector<8xf32>
    %75 = vector.shape_cast %74 : vector<8xf32> to vector<8x1xf32>
    %cst_30 = arith.constant 1.000000e+00 : f32
    %76 = vector.broadcast %cst_30 : f32 to vector<8x1xf32>
    %77 = arith.divf %76, %75 : vector<8x1xf32>
    %78 = vector.broadcast %77 : vector<8x1xf32> to vector<8x8xf32>
    %79 = arith.mulf %73, %78 : vector<8x8xf32>
    %cst_31 = arith.constant dense<0.000000e+00> : vector<8x8xf32>
    %80 = tpu.matmul %79, %65, %cst_31 {dimension_numbers = #tpu.dot_dimension_numbers<[1], [0], [0], [1], [0, 0, 1, 1], [], []>} : vector<8x8xf32>, vector<8x8xf32>, vector<8x8xf32> -> vector<8x8xf32>
    %81 = tpu.concatenate %26, %44, %62, %80 in 1 : vector<8x8xf32>, vector<8x8xf32>, vector<8x8xf32>, vector<8x8xf32> -> vector<8x32xf32>
    %cst_32 = arith.constant dense<0.000000e+00> : vector<8x32xf32>
    %82 = tpu.matmul %81, %3, %cst_32 {dimension_numbers = #tpu.dot_dimension_numbers<[1], [0], [0], [1], [0, 0, 1, 1], [], []>} : vector<8x32xf32>, vector<32x32xf32>, vector<8x32xf32> -> vector<8x32xf32>
    %83 = vector.broadcast %4 : vector<1x32xf32> to vector<8x32xf32>
    %84 = arith.addf %82, %83 : vector<8x32xf32>
    %c0_33 = arith.constant 0 : index
    %c0_34 = arith.constant 0 : index
    %c0_35 = arith.constant 0 : index
    %85 = vector.load %arg5[%c0_33, %c0_34, %c0_35] : memref<1x8x32xf32, #tpu.memory_space<vmem>>, vector<1x8x32xf32>
    %86 = vector.shape_cast %85 : vector<1x8x32xf32> to vector<8x32xf32>
    %87 = vector.shape_cast %84 : vector<8x32xf32> to vector<1x8x32xf32>
    tpu.vector_store %arg5[%c0_33, %c0_34, %c0_35], %87 {strides = array<i32>} : memref<1x8x32xf32, #tpu.memory_space<vmem>>, vector<1x8x32xf32>,
    return
  }
  func.func @transform_0(%arg0: i32) -> (i32, i32, i32) {
    %c0_i32 = arith.constant 0 : i32
    %c0_i32_0 = arith.constant 0 : i32
    %c0_i32_1 = arith.constant 0 : i32
    return %arg0, %c0_i32, %c0_i32_0 : i32, i32, i32
  }
  func.func @transform_1(%arg0: i32) -> (i32, i32) {
    %c0_i32 = arith.constant 0 : i32
    %c0_i32_0 = arith.constant 0 : i32
    %c0_i32_1 = arith.constant 0 : i32
    return %c0_i32, %c0_i32_0 : i32, i32
  }
  func.func @transform_2(%arg0: i32) -> (i32, i32) {
    %c0_i32 = arith.constant 0 : i32
    %c0_i32_0 = arith.constant 0 : i32
    %c0_i32_1 = arith.constant 0 : i32
    return %c0_i32, %c0_i32_0 : i32, i32
  }
  func.func @transform_3(%arg0: i32) -> (i32, i32) {
    %c0_i32 = arith.constant 0 : i32
    %c0_i32_0 = arith.constant 0 : i32
    %c0_i32_1 = arith.constant 0 : i32
    return %c0_i32, %c0_i32_0 : i32, i32
  }
  func.func @transform_4(%arg0: i32) -> (i32, i32, i32) {
    %c0_i32 = arith.constant 0 : i32
    %c0_i32_0 = arith.constant 0 : i32
    %c0_i32_1 = arith.constant 0 : i32
    return %arg0, %c0_i32, %c0_i32_0 : i32, i32, i32
  }
}

</mosaic_0001>

<llo_original>
// kernel: tpu_custom_call.1
$region0: #{tpu_custom_call.1}
  #allocation0 [shape = 'u32[]', space=smem, size = 0x4, offset = 0x4, fixed_abs, tag = 'smem constant byte address 0x4 - core index']
  #allocation1 [shape = 'u32[144,128]{1,0:T(1,128)}', space=vmem, size = 0x12000, scoped, tag = 'internal scratch']
  %s0 = inlined_call_operand.hbm [shape: f32[2,8,32], index: 0, kind: input, shape index: {}]
  %s1 = inlined_call_operand.hbm [shape: f32[32,96], index: 1, kind: input, shape index: {}]
  %s2 = inlined_call_operand.hbm [shape: f32[32,32], index: 2, kind: input, shape index: {}]
  %s3 = inlined_call_operand.vmem [shape: f32[1,32], index: 3, kind: input, shape index: {}]
  %s4 = inlined_call_operand.hbm [shape: f32[2,8,32], index: 4, kind: output, shape index: {}]
  %s5 = sld [smem:[#allocation0]]
  $region61: #{tpu_custom_call.1} parent=0
    _
  %s7 = ssub.s32 1, %s5
  %s8 = scalar_select 0, %s7, %s5
  $region1: #{tpu_custom_call.1} parent=0
    #allocation2 [shape = 'u8[8192]{0}', space=vmem, size = 0x2000, scoped, tag = 'input window, operand 0']
    #allocation3 [shape = 's32[2]{0}', space=sflag, size = 0x8, scoped, tag = 'scoped memory for tpu_custom_call.1']
    #allocation4 [shape = 's32[2]{0}', space=sflag, size = 0x8, scoped, tag = 'scoped memory for tpu_custom_call.1']
    #allocation5 [shape = 'u8[16384]{0}', space=vmem, size = 0x4000, scoped, tag = 'input window, operand 1, single buffered']
    #allocation6 [shape = 's32[1]{0}', space=sflag, size = 0x4, scoped, tag = 'scoped memory for tpu_custom_call.1']
    #allocation7 [shape = 'u8[16384]{0}', space=vmem, size = 0x4000, scoped, tag = 'input window, operand 2, single buffered']
    #allocation8 [shape = 'u8[8192]{0}', space=vmem, size = 0x2000, scoped, tag = 'output window, operand 0']
    %9 = vsyncpa [#allocation3], 0
    %s10 = scalar_lea.sflag [#allocation3], 1
    %11 = vsyncpa %s10, 0
    %12 = vsyncpa [#allocation6], 0
    %13 = vsyncpa [#allocation4], 0
    %s14 = scalar_lea.sflag [#allocation4], 1
    %15 = vsyncpa %s14, 0
    loop: start=0, step=1, limit=4
    $region2: #{tpu_custom_call.1} parent=1 // loop_pre_header
      _
    $region3: #{tpu_custom_call.1} parent=1 // loop_header
      %s17 = sphi 0, %s21
      %p18 = scmp.ge.s32.totalorder %s17, 4
      %s27 = sphi 0, %s29
      %s30 = sphi 0, %s27
      %s31 = sphi 0, %s30
      %s47 = sphi 0, %s31
      %s51 = sphi 0, %s51
      %s53 = sphi 0, %s51
      %s54 = sphi 0, %s53
      %s68 = sphi 0, %s54
      %s72 = sphi 0, %s72
      %s74 = sphi 0, %s72
      %s75 = sphi 0, %s74
      %s89 = sphi 0, %s75
      %s93 = sphi 0, %s93
      %s95 = sphi 0, %s93
      %s96 = sphi 0, %s95
      %s110 = sphi 0, %s96
      %s116 = sphi 0, %s118
      %s119 = sphi 0, %s116
      %s120 = sphi 0, %s119
      %s136 = sphi 0, %s120
    $region4: #{tpu_custom_call.1} parent=1 // loop_header_branch
      %20 = sbr.rel (%p18) target = $region8
    $region5: #{tpu_custom_call.1} parent=1 // loop_body
      %s22 = ssub.s32 %s17, 1
      %s23 = ssub.s32 %s17, 2
      %s24 = sadd.s32 %s17, 1
      %s25 = ssub.s32 %s17, %s24
      %p26 = scmp.eq.s32.totalorder %s25, 0
      %s28 = sadd.s32 %s27, 1
      %s29 = scalar_select %p26, %s27, %s28
      %p32 = pneg %p26
      %p33 = scmp.eq.s32.totalorder %s17, 1
      %p34 = por %p32, %p33
      %p35 = scmp.ne.s32.totalorder %s27, %s30
      %p36 = scmp.eq.s32.totalorder %s17, 0
      %p37 = por %p35, %p36
      %p38 = scmp.ne.s32.totalorder %s27, %s30
      %p39 = scmp.eq.s32.totalorder %s22, 1
      %p40 = por %p38, %p39
      %p41 = scmp.ne.s32.totalorder %s30, %s31
      %p42 = scmp.eq.s32.totalorder %s22, 0
      %p43 = por %p41, %p42
      %p44 = scmp.ne.s32.totalorder %s30, %s31
      %p45 = scmp.eq.s32.totalorder %s23, 1
      %p46 = por %p44, %p45
      %p48 = scmp.ne.s32.totalorder %s31, %s47
      %p49 = scmp.eq.s32.totalorder %s23, 0
      %p50 = por %p48, %p49
      %s52 = sadd.s32 %s51, 1
      %p55 = scmp.eq.s32.totalorder %s17, 1
      %p56 = scmp.ne.s32.totalorder %s51, %s53
      %p57 = scmp.eq.s32.totalorder %s17, 0
      %p58 = por %p56, %p57
      %p59 = scmp.ne.s32.totalorder %s51, %s53
      %p60 = scmp.eq.s32.totalorder %s22, 1
      %p61 = por %p59, %p60
      %p62 = scmp.ne.s32.totalorder %s53, %s54
      %p63 = scmp.eq.s32.totalorder %s22, 0
      %p64 = por %p62, %p63
      %p65 = scmp.ne.s32.totalorder %s53, %s54
      %p66 = scmp.eq.s32.totalorder %s23, 1
      %p67 = por %p65, %p66
      %p69 = scmp.ne.s32.totalorder %s54, %s68
      %p70 = scmp.eq.s32.totalorder %s23, 0
      %p71 = por %p69, %p70
      %s73 = sadd.s32 %s72, 1
      %p76 = scmp.eq.s32.totalorder %s17, 1
      %p77 = scmp.ne.s32.totalorder %s72, %s74
      %p78 = scmp.eq.s32.totalorder %s17, 0
      %p79 = por %p77, %p78
      %p80 = scmp.ne.s32.totalorder %s72, %s74
      %p81 = scmp.eq.s32.totalorder %s22, 1
      %p82 = por %p80, %p81
      %p83 = scmp.ne.s32.totalorder %s74, %s75
      %p84 = scmp.eq.s32.totalorder %s22, 0
      %p85 = por %p83, %p84
      %p86 = scmp.ne.s32.totalorder %s74, %s75
      %p87 = scmp.eq.s32.totalorder %s23, 1
      %p88 = por %p86, %p87
      %p90 = scmp.ne.s32.totalorder %s75, %s89
      %p91 = scmp.eq.s32.totalorder %s23, 0
      %p92 = por %p90, %p91
      %s94 = sadd.s32 %s93, 1
      %p97 = scmp.eq.s32.totalorder %s17, 1
      %p98 = scmp.ne.s32.totalorder %s93, %s95
      %p99 = scmp.eq.s32.totalorder %s17, 0
      %p100 = por %p98, %p99
      %p101 = scmp.ne.s32.totalorder %s93, %s95
      %p102 = scmp.eq.s32.totalorder %s22, 1
      %p103 = por %p101, %p102
      %p104 = scmp.ne.s32.totalorder %s95, %s96
      %p105 = scmp.eq.s32.totalorder %s22, 0
      %p106 = por %p104, %p105
      %p107 = scmp.ne.s32.totalorder %s95, %s96
      %p108 = scmp.eq.s32.totalorder %s23, 1
      %p109 = por %p107, %p108
      %p111 = scmp.ne.s32.totalorder %s96, %s110
      %p112 = scmp.eq.s32.totalorder %s23, 0
      %p113 = por %p111, %p112
      %s114 = ssub.s32 %s17, %s24
      %p115 = scmp.eq.s32.totalorder %s114, 0
      %s117 = sadd.s32 %s116, 1
      %s118 = scalar_select %p115, %s116, %s117
      %p121 = pneg %p115
      %p122 = scmp.eq.s32.totalorder %s17, 1
      %p123 = por %p121, %p122
      %p124 = scmp.ne.s32.totalorder %s116, %s119
      %p125 = scmp.eq.s32.totalorder %s17, 0
      %p126 = por %p124, %p125
      %p127 = scmp.ne.s32.totalorder %s116, %s119
      %p128 = scmp.eq.s32.totalorder %s22, 1
      %p129 = por %p127, %p128
      %p130 = scmp.ne.s32.totalorder %s119, %s120
      %p131 = scmp.eq.s32.totalorder %s22, 0
      %p132 = por %p130, %p131
      %p133 = scmp.ne.s32.totalorder %s119, %s120
      %p134 = scmp.eq.s32.totalorder %s23, 1
      %p135 = por %p133, %p134
      %p137 = scmp.ne.s32.totalorder %s120, %s136
      %p138 = scmp.eq.s32.totalorder %s23, 0
      %p139 = por %p137, %p138
      %p140 = scmp.le.s32.totalorder 1, %s17
      %p141 = scmp.lt.s32.totalorder %s17, 3
      %p142 = pnand %p140, %p141
      %p143 = pneg %p142
      // Predicated region
      $region9: #{tpu_custom_call.1} parent=5 // pred_check
        _
      $region10: #{tpu_custom_call.1} parent=5 // pred_check_branch
        %145 = sbr.rel (%p142) target = $region12
      $region11: #{tpu_custom_call.1} parent=5 // pred_region
        %s146 = ssub.s32 %s17, 1
        // Predicated region
        $region13: #{tpu_custom_call.1} parent=11 // pred_check
          %p147 = pneg %p64
        $region14: #{tpu_custom_call.1} parent=11 // pred_check_branch
          %149 = sbr.rel (%p147) target = $region16
        $region15: #{tpu_custom_call.1} parent=11 // pred_region
          %s151 = ssub.s32 512, 512
          %152 = vsyncadd [#allocation6], %s151
          %s153 = sshll.u32 [#allocation5], 4
          %s154 = int_to_ptr.vmem [resolvable:$true] %s153
          %159 = dma.hbm_to_vmem [thread:$0]  %s1, 512, %s154, [#allocation6], 128, 128, 8
        $region16: #{tpu_custom_call.1} parent=11 // pred_fallthru
          _
        // Predicated region
        $region17: #{tpu_custom_call.1} parent=11 // pred_check
          %p160 = pneg %p85
        $region18: #{tpu_custom_call.1} parent=11 // pred_check_branch
          %162 = sbr.rel (%p160) target = $region20
        $region19: #{tpu_custom_call.1} parent=11 // pred_region
          %s164 = ssub.s32 512, 512
          %165 = vsyncadd [#allocation6], %s164
          %s166 = sshll.u32 [#allocation7], 4
          %s167 = int_to_ptr.vmem [resolvable:$true] %s166
          %172 = dma.hbm_to_vmem [thread:$0]  %s2, 512, %s167, [#allocation6], 128, 128, 8
        $region20: #{tpu_custom_call.1} parent=11 // pred_fallthru
          _
        // Predicated region
        $region21: #{tpu_custom_call.1} parent=11 // pred_check
          %p173 = pneg %p106
        $region22: #{tpu_custom_call.1} parent=11 // pred_check_branch
          %175 = sbr.rel (%p173) target = $region24
        $region23: #{tpu_custom_call.1} parent=11 // pred_region
          _
        $region24: #{tpu_custom_call.1} parent=11 // pred_fallthru
          _
      $region12: #{tpu_custom_call.1} parent=5 // pred_fallthru
        _
      %p176 = scmp.lt.s32.totalorder %s17, 2
      // Predicated region
      $region25: #{tpu_custom_call.1} parent=5 // pred_check
        %p177 = pneg %p176
      $region26: #{tpu_custom_call.1} parent=5 // pred_check_branch
        %179 = sbr.rel (%p177) target = $region28
      $region27: #{tpu_custom_call.1} parent=5 // pred_region
        // Predicated region
        $region29: #{tpu_custom_call.1} parent=27 // pred_check
          %p180 = pneg %p37
        $region30: #{tpu_custom_call.1} parent=27 // pred_check_branch
          %182 = sbr.rel (%p180) target = $region32
        $region31: #{tpu_custom_call.1} parent=27 // pred_region
          %s183 = sand.u32 %s27, 1
          %s184 = scalar_lea.sflag [#allocation3], %s183
          %s185 = sand.u32 %s27, 1
          %s186 = smul.addr %s185, 8
          %s187 = scalar_lea.vmem [#allocation2], %s186
          %s189 = ssub.s32 128, 128
          %190 = vsyncadd %s184, %s189
          %s191 = smul.addr %s17, 128
          %s192 = scalar_lea.hbm %s0, %s191
          %s194 = sshll.u32 %s187, 4
          %s195 = int_to_ptr.vmem [resolvable:$true] %s194
          %197 = dma.hbm_to_vmem [thread:$0]  %s192, 128, %s195, %s184
        $region32: #{tpu_custom_call.1} parent=27 // pred_fallthru
          _
      $region28: #{tpu_custom_call.1} parent=5 // pred_fallthru
        _
      %p198 = scmp.le.s32.totalorder 1, %s17
      %p199 = scmp.lt.s32.totalorder %s17, 3
      %p200 = pnand %p198, %p199
      %p201 = pneg %p200
      // Predicated region
      $region33: #{tpu_custom_call.1} parent=5 // pred_check
        _
      $region34: #{tpu_custom_call.1} parent=5 // pred_check_branch
        %203 = sbr.rel (%p200) target = $region36
      $region35: #{tpu_custom_call.1} parent=5 // pred_region
        %s204 = ssub.s32 %s17, 1
        %s205 = sand.u32 %s30, 1
        %s206 = scalar_lea.sflag [#allocation3], %s205
        %s207 = sand.u32 %s30, 1
        %s208 = smul.addr %s207, 8
        %s209 = scalar_lea.vmem [#allocation2], %s208
        // Predicated region
        $region37: #{tpu_custom_call.1} parent=35 // pred_check
          %p210 = pneg %p43
        $region38: #{tpu_custom_call.1} parent=35 // pred_check_branch
          %212 = sbr.rel (%p210) target = $region40
        $region39: #{tpu_custom_call.1} parent=35 // pred_region
          %213 = dma.done %s206, 128
        $region40: #{tpu_custom_call.1} parent=35 // pred_fallthru
          _
        // Predicated region
        $region41: #{tpu_custom_call.1} parent=35 // pred_check
          %p214 = pneg %p64
        $region42: #{tpu_custom_call.1} parent=35 // pred_check_branch
          %216 = sbr.rel (%p214) target = $region44
        $region43: #{tpu_custom_call.1} parent=35 // pred_region
          %217 = dma.done [#allocation6], 512
        $region44: #{tpu_custom_call.1} parent=35 // pred_fallthru
          _
        // Predicated region
        $region45: #{tpu_custom_call.1} parent=35 // pred_check
          %p218 = pneg %p85
        $region46: #{tpu_custom_call.1} parent=35 // pred_check_branch
          %220 = sbr.rel (%p218) target = $region48
        $region47: #{tpu_custom_call.1} parent=35 // pred_region
          %221 = dma.done [#allocation6], 512
        $region48: #{tpu_custom_call.1} parent=35 // pred_fallthru
          _
        %s222 = sand.u32 %s30, 1
        %s223 = scalar_lea.sflag [#allocation3], %s222
        %s224 = sand.u32 %s30, 1
        %s225 = smul.addr %s224, 8
        %s226 = scalar_lea.vmem [#allocation2], %s225
        %p227 = pneg %p43
        %p228 = pneg %p40
        %p229 = pneg %p64
        %p230 = pneg %p61
        %p231 = pneg %p85
        %p232 = pneg %p82
        %p233 = pneg %p106
        %p234 = pneg %p103
        %p235 = pneg %p132
        %p236 = pneg %p129
        %s237 = sand.u32 %s119, 1
        %s238 = scalar_lea.sflag [#allocation4], %s237
        %s239 = sand.u32 %s119, 1
        %s240 = smul.addr %s239, 8
        %s241 = scalar_lea.vmem [#allocation8], %s240
        %v242 = vld [vmem:[%s209] sm:$0xff]
        %v243 = vld [vmem:[#allocation5] sm:$0xff]
        %v244 = vld [vmem:[#allocation5 + $0x8] sm:$0xff]
        %v245 = vld [vmem:[#allocation5 + $0x10] sm:$0xff]
        %v246 = vld [vmem:[#allocation5 + $0x18] sm:$0xff]
        %v247 = vld [vmem:[#allocation7] sm:$0xff]
        %v248 = vld [vmem:[#allocation7 + $0x8] sm:$0xff]
        %v249 = vld [vmem:[#allocation7 + $0x10] sm:$0xff]
        %v250 = vld [vmem:[#allocation7 + $0x18] sm:$0xff]
        %v251 = vld [vmem:[%s3] sm:$0x1]
        %vm252 = vcmask 261120
        %v254 = vsel %vm252, %v242, 0
        %256 = vmatprep.subr.mxu0 0.0
        %257 = vmatpush1.msra.mxu0 0.0
        %258 = vmatprep.subr.mxu0 0.0
        %259 = vmatpush1.msra.mxu0 0.0
        %260 = vmatprep.subr.mxu0 0.0
        %261 = vmatpush1.msra.mxu0 0.0
        %262 = vmatprep.subr.mxu0 0.0
        %263 = vmatpush1.msra.mxu0 0.0
        %264 = vmatprep.subr.mxu0 0.0
        %265 = vmatpush1.msra.mxu0 0.0
        %266 = vmatprep.subr.mxu0 0.0
        %267 = vmatpush1.msra.mxu0 0.0
        %268 = vmatprep.subr.mxu0 0.0
        %269 = vmatpush1.msra.mxu0 0.0
        %270 = vmatprep.subr.mxu0 0.0
        %271 = vmatpush1.msra.mxu0 0.0
        %272 = vmatprep.subr.mxu0 0.0
        %273 = vmatpush1.msra.mxu0 0.0
        %274 = vmatprep.subr.mxu0 0.0
        %275 = vmatpush1.msra.mxu0 0.0
        %276 = vmatprep.subr.mxu0 0.0
        %277 = vmatpush1.msra.mxu0 0.0
        %278 = vmatprep.subr.mxu0 0.0
        %279 = vmatpush1.msra.mxu0 0.0
        %280 = vmatprep.subr.mxu0 0.0
        %281 = vmatpush1.msra.mxu0 %v246
        %282 = vmatprep.subr.mxu0 0.0
        %283 = vmatpush1.msra.mxu0 %v245
        %284 = vmatprep.subr.mxu0 0.0
        %285 = vmatpush1.msra.mxu0 %v244
        %286 = vmatprep.subr.mxu0 0.0
        %287 = vmatpush1.msra.mxu0 %v243
        %288 = vmatprep.subr.mxu0 0.0
        %289 = vmatpush2.msra.mxu0 0.0
        %290 = vmatprep.subr.mxu0 0.0
        %291 = vmatpush2.msra.mxu0 0.0
        %292 = vmatprep.subr.mxu0 0.0
        %293 = vmatpush2.msra.mxu0 0.0
        %294 = vmatprep.subr.mxu0 0.0
        %295 = vmatpush2.msra.mxu0 0.0
        %296 = vmatprep.subr.mxu0 0.0
        %297 = vmatpush2.msra.mxu0 0.0
        %298 = vmatprep.subr.mxu0 0.0
        %299 = vmatpush2.msra.mxu0 0.0
        %300 = vmatprep.subr.mxu0 0.0
        %301 = vmatpush2.msra.mxu0 0.0
        %302 = vmatprep.subr.mxu0 0.0
        %303 = vmatpush2.msra.mxu0 0.0
        %304 = vmatprep.subr.mxu0 0.0
        %305 = vmatpush2.msra.mxu0 0.0
        %306 = vmatprep.subr.mxu0 0.0
        %307 = vmatpush2.msra.mxu0 0.0
        %308 = vmatprep.subr.mxu0 0.0
        %309 = vmatpush2.msra.mxu0 0.0
        %310 = vmatprep.subr.mxu0 0.0
        %311 = vmatpush2.msra.mxu0 0.0
        %312 = vmatprep.subr.mxu0 0.0
        %313 = vmatpush2.msra.mxu0 0.0
        %314 = vmatprep.subr.mxu0 0.0
        %315 = vmatpush2.msra.mxu0 0.0
        %316 = vmatprep.subr.mxu0 0.0
        %317 = vmatpush2.msra.mxu0 0.0
        %318 = vmatprep.subr.mxu0 0.0
        %319 = vmatpush2.msra.mxu0 0.0
        %320 = vmatprep.mubr.f32.mxu0 0.0
        %321 = vmatmul.mubr.f32.gmra.mxu0 %v254
        %v322 = vpop.f32.mrf.mxu0
        %v323 = vadd.f32 0.0, %v322
        %v324 = vpop.f32.mrf.mxu0
        %325 = vdwg.mxu0
        %v326 = vlaneseq
        %v327 = vshrl.u32 %v326, 7
        %v328 = vlaneseq
        %v329 = vand.u32 %v328, 127
        %vm330 = vcmp.le.s32.totalorder %v329, %v327
        %332 = vrot.lane.b32.xlu0 %v323, 96
        %v333 = vpop.permute.xlu0 %332
        %vm334 = vcmask 64512
        %v335 = vsel %vm334, %v323, 0
        %v337 = vsel %vm334, %v333, 0
        %339 = vmatprep.subr.mxu0 0.0
        %340 = vmatpush1.xpose.msra.mxu0 0.0
        %341 = vmatprep.subr.mxu0 0.0
        %342 = vmatpush1.xpose.msra.mxu0 0.0
        %343 = vmatprep.subr.mxu0 0.0
        %344 = vmatpush1.xpose.msra.mxu0 0.0
        %345 = vmatprep.subr.mxu0 0.0
        %346 = vmatpush1.xpose.msra.mxu0 0.0
        %347 = vmatprep.subr.mxu0 0.0
        %348 = vmatpush1.xpose.msra.mxu0 0.0
        %349 = vmatprep.subr.mxu0 0.0
        %350 = vmatpush1.xpose.msra.mxu0 0.0
        %351 = vmatprep.subr.mxu0 0.0
        %352 = vmatpush1.xpose.msra.mxu0 0.0
        %353 = vmatprep.subr.mxu0 0.0
        %354 = vmatpush1.xpose.msra.mxu0 0.0
        %355 = vmatprep.subr.mxu0 0.0
        %356 = vmatpush1.xpose.msra.mxu0 0.0
        %357 = vmatprep.subr.mxu0 0.0
        %358 = vmatpush1.xpose.msra.mxu0 0.0
        %359 = vmatprep.subr.mxu0 0.0
        %360 = vmatpush1.xpose.msra.mxu0 0.0
        %361 = vmatprep.subr.mxu0 0.0
        %362 = vmatpush1.xpose.msra.mxu0 0.0
        %363 = vmatprep.subr.mxu0 0.0
        %364 = vmatpush1.xpose.msra.mxu0 0.0
        %365 = vmatprep.subr.mxu0 0.0
        %366 = vmatpush1.xpose.msra.mxu0 0.0
        %367 = vmatprep.subr.mxu0 0.0
        %368 = vmatpush1.xpose.msra.mxu0 0.0
        %369 = vmatprep.subr.mxu0 0.0
        %370 = vmatpush1.xpose.msra.mxu0 %v337
        %371 = vmatprep.subr.mxu0 0.0
        %372 = vmatpush2.xpose.msra.mxu0 0.0
        %373 = vmatprep.subr.mxu0 0.0
        %374 = vmatpush2.xpose.msra.mxu0 0.0
        %375 = vmatprep.subr.mxu0 0.0
        %376 = vmatpush2.xpose.msra.mxu0 0.0
        %377 = vmatprep.subr.mxu0 0.0
        %378 = vmatpush2.xpose.msra.mxu0 0.0
        %379 = vmatprep.subr.mxu0 0.0
        %380 = vmatpush2.xpose.msra.mxu0 0.0
        %381 = vmatprep.subr.mxu0 0.0
        %382 = vmatpush2.xpose.msra.mxu0 0.0
        %383 = vmatprep.subr.mxu0 0.0
        %384 = vmatpush2.xpose.msra.mxu0 0.0
        %385 = vmatprep.subr.mxu0 0.0
        %386 = vmatpush2.xpose.msra.mxu0 0.0
        %387 = vmatprep.subr.mxu0 0.0
        %388 = vmatpush2.xpose.msra.mxu0 0.0
        %389 = vmatprep.subr.mxu0 0.0
        %390 = vmatpush2.xpose.msra.mxu0 0.0
        %391 = vmatprep.subr.mxu0 0.0
        %392 = vmatpush2.xpose.msra.mxu0 0.0
        %393 = vmatprep.subr.mxu0 0.0
        %394 = vmatpush2.xpose.msra.mxu0 0.0
        %395 = vmatprep.subr.mxu0 0.0
        %396 = vmatpush2.xpose.msra.mxu0 0.0
        %397 = vmatprep.subr.mxu0 0.0
        %398 = vmatpush2.xpose.msra.mxu0 0.0
        %399 = vmatprep.subr.mxu0 0.0
        %400 = vmatpush2.xpose.msra.mxu0 0.0
        %401 = vmatprep.subr.mxu0 0.0
        %402 = vmatpush2.xpose.msra.mxu0 0.0
        %403 = vmatprep.mubr.f32.mxu0 0.0
        %404 = vmatmul.mubr.f32.gmra.mxu0 %v335
        %v405 = vpop.f32.mrf.mxu0
        %v406 = vadd.f32 0.0, %v405
        %v407 = vpop.f32.mrf.mxu0
        %408 = vdwg.mxu0
        %v409 = vsel %vm330, %v406, -1e+30
        %v410 = vsel %vm334, %v409, -inf
        %411 = vmax.xlane.f32.xlu0 %v410
        %v412 = vpop.xlane.xlu0 %411
        %v413 = vsub.f32 %v409, %v412
        %v414 = vmul.f32 %v413, 1.442695
        %v415 = vpow.pop %v414
        %v416 = vsel %vm334, %v415, 0.0
        %417 = vadd.xlane.f32.xlu0 %v416
        %v418 = vpop.xlane.xlu0 %417
        %v419 = vrcp.pop %v418
        %v420 = vmul.f32 1.0, %v419
        %v421 = vmul.f32 %v415, %v420
        %422 = vrot.lane.b32.xlu0 %v323, 64
        %v423 = vpop.permute.xlu0 %422
        %v426 = vsel %vm334, %v421, 0
        %428 = vmatprep.subr.mxu0 0.0
        %429 = vmatpush1.msra.mxu0 0.0
        %430 = vmatprep.subr.mxu0 0.0
        %431 = vmatpush1.msra.mxu0 0.0
        %432 = vmatprep.subr.mxu0 0.0
        %433 = vmatpush1.msra.mxu0 0.0
        %434 = vmatprep.subr.mxu0 0.0
        %435 = vmatpush1.msra.mxu0 0.0
        %436 = vmatprep.subr.mxu0 0.0
        %437 = vmatpush1.msra.mxu0 0.0
        %438 = vmatprep.subr.mxu0 0.0
        %439 = vmatpush1.msra.mxu0 0.0
        %440 = vmatprep.subr.mxu0 0.0
        %441 = vmatpush1.msra.mxu0 0.0
        %442 = vmatprep.subr.mxu0 0.0
        %443 = vmatpush1.msra.mxu0 0.0
        %444 = vmatprep.subr.mxu0 0.0
        %445 = vmatpush1.msra.mxu0 0.0
        %446 = vmatprep.subr.mxu0 0.0
        %447 = vmatpush1.msra.mxu0 0.0
        %448 = vmatprep.subr.mxu0 0.0
        %449 = vmatpush1.msra.mxu0 0.0
        %450 = vmatprep.subr.mxu0 0.0
        %451 = vmatpush1.msra.mxu0 0.0
        %452 = vmatprep.subr.mxu0 0.0
        %453 = vmatpush1.msra.mxu0 0.0
        %454 = vmatprep.subr.mxu0 0.0
        %455 = vmatpush1.msra.mxu0 0.0
        %456 = vmatprep.subr.mxu0 0.0
        %457 = vmatpush1.msra.mxu0 0.0
        %458 = vmatprep.subr.mxu0 0.0
        %459 = vmatpush1.msra.mxu0 %v423
        %460 = vmatprep.subr.mxu0 0.0
        %461 = vmatpush2.msra.mxu0 0.0
        %462 = vmatprep.subr.mxu0 0.0
        %463 = vmatpush2.msra.mxu0 0.0
        %464 = vmatprep.subr.mxu0 0.0
        %465 = vmatpush2.msra.mxu0 0.0
        %466 = vmatprep.subr.mxu0 0.0
        %467 = vmatpush2.msra.mxu0 0.0
        %468 = vmatprep.subr.mxu0 0.0
        %469 = vmatpush2.msra.mxu0 0.0
        %470 = vmatprep.subr.mxu0 0.0
        %471 = vmatpush2.msra.mxu0 0.0
        %472 = vmatprep.subr.mxu0 0.0
        %473 = vmatpush2.msra.mxu0 0.0
        %474 = vmatprep.subr.mxu0 0.0
        %475 = vmatpush2.msra.mxu0 0.0
        %476 = vmatprep.subr.mxu0 0.0
        %477 = vmatpush2.msra.mxu0 0.0
        %478 = vmatprep.subr.mxu0 0.0
        %479 = vmatpush2.msra.mxu0 0.0
        %480 = vmatprep.subr.mxu0 0.0
        %481 = vmatpush2.msra.mxu0 0.0
        %482 = vmatprep.subr.mxu0 0.0
        %483 = vmatpush2.msra.mxu0 0.0
        %484 = vmatprep.subr.mxu0 0.0
        %485 = vmatpush2.msra.mxu0 0.0
        %486 = vmatprep.subr.mxu0 0.0
        %487 = vmatpush2.msra.mxu0 0.0
        %488 = vmatprep.subr.mxu0 0.0
        %489 = vmatpush2.msra.mxu0 0.0
        %490 = vmatprep.subr.mxu0 0.0
        %491 = vmatpush2.msra.mxu0 0.0
        %492 = vmatprep.mubr.f32.mxu0 0.0
        %493 = vmatmul.mubr.f32.gmra.mxu0 %v426
        %v494 = vpop.f32.mrf.mxu0
        %v495 = vadd.f32 0.0, %v494
        %v496 = vpop.f32.mrf.mxu0
        %497 = vdwg.mxu0
        %498 = vrot.lane.b32.xlu0 %v323, 120
        %v499 = vpop.permute.xlu0 %498
        %500 = vrot.lane.b32.xlu0 %v323, 88
        %v501 = vpop.permute.xlu0 %500
        %v502 = vsel %vm334, %v499, 0
        %v504 = vsel %vm334, %v501, 0
        %506 = vmatprep.subr.mxu0 0.0
        %507 = vmatpush1.xpose.msra.mxu0 0.0
        %508 = vmatprep.subr.mxu0 0.0
        %509 = vmatpush1.xpose.msra.mxu0 0.0
        %510 = vmatprep.subr.mxu0 0.0
        %511 = vmatpush1.xpose.msra.mxu0 0.0
        %512 = vmatprep.subr.mxu0 0.0
        %513 = vmatpush1.xpose.msra.mxu0 0.0
        %514 = vmatprep.subr.mxu0 0.0
        %515 = vmatpush1.xpose.msra.mxu0 0.0
        %516 = vmatprep.subr.mxu0 0.0
        %517 = vmatpush1.xpose.msra.mxu0 0.0
        %518 = vmatprep.subr.mxu0 0.0
        %519 = vmatpush1.xpose.msra.mxu0 0.0
        %520 = vmatprep.subr.mxu0 0.0
        %521 = vmatpush1.xpose.msra.mxu0 0.0
        %522 = vmatprep.subr.mxu0 0.0
        %523 = vmatpush1.xpose.msra.mxu0 0.0
        %524 = vmatprep.subr.mxu0 0.0
        %525 = vmatpush1.xpose.msra.mxu0 0.0
        %526 = vmatprep.subr.mxu0 0.0
        %527 = vmatpush1.xpose.msra.mxu0 0.0
        %528 = vmatprep.subr.mxu0 0.0
        %529 = vmatpush1.xpose.msra.mxu0 0.0
        %530 = vmatprep.subr.mxu0 0.0
        %531 = vmatpush1.xpose.msra.mxu0 0.0
        %532 = vmatprep.subr.mxu0 0.0
        %533 = vmatpush1.xpose.msra.mxu0 0.0
        %534 = vmatprep.subr.mxu0 0.0
        %535 = vmatpush1.xpose.msra.mxu0 0.0
        %536 = vmatprep.subr.mxu0 0.0
        %537 = vmatpush1.xpose.msra.mxu0 %v504
        %538 = vmatprep.subr.mxu0 0.0
        %539 = vmatpush2.xpose.msra.mxu0 0.0
        %540 = vmatprep.subr.mxu0 0.0
        %541 = vmatpush2.xpose.msra.mxu0 0.0
        %542 = vmatprep.subr.mxu0 0.0
        %543 = vmatpush2.xpose.msra.mxu0 0.0
        %544 = vmatprep.subr.mxu0 0.0
        %545 = vmatpush2.xpose.msra.mxu0 0.0
        %546 = vmatprep.subr.mxu0 0.0
        %547 = vmatpush2.xpose.msra.mxu0 0.0
        %548 = vmatprep.subr.mxu0 0.0
        %549 = vmatpush2.xpose.msra.mxu0 0.0
        %550 = vmatprep.subr.mxu0 0.0
        %551 = vmatpush2.xpose.msra.mxu0 0.0
        %552 = vmatprep.subr.mxu0 0.0
        %553 = vmatpush2.xpose.msra.mxu0 0.0
        %554 = vmatprep.subr.mxu0 0.0
        %555 = vmatpush2.xpose.msra.mxu0 0.0
        %556 = vmatprep.subr.mxu0 0.0
        %557 = vmatpush2.xpose.msra.mxu0 0.0
        %558 = vmatprep.subr.mxu0 0.0
        %559 = vmatpush2.xpose.msra.mxu0 0.0
        %560 = vmatprep.subr.mxu0 0.0
        %561 = vmatpush2.xpose.msra.mxu0 0.0
        %562 = vmatprep.subr.mxu0 0.0
        %563 = vmatpush2.xpose.msra.mxu0 0.0
        %564 = vmatprep.subr.mxu0 0.0
        %565 = vmatpush2.xpose.msra.mxu0 0.0
        %566 = vmatprep.subr.mxu0 0.0
        %567 = vmatpush2.xpose.msra.mxu0 0.0
        %568 = vmatprep.subr.mxu0 0.0
        %569 = vmatpush2.xpose.msra.mxu0 0.0
        %570 = vmatprep.mubr.f32.mxu0 0.0
        %571 = vmatmul.mubr.f32.gmra.mxu0 %v502
        %v572 = vpop.f32.mrf.mxu0
        %v573 = vadd.f32 0.0, %v572
        %v574 = vpop.f32.mrf.mxu0
        %575 = vdwg.mxu0
        %v576 = vsel %vm330, %v573, -1e+30
        %v577 = vsel %vm334, %v576, -inf
        %578 = vmax.xlane.f32.xlu0 %v577
        %v579 = vpop.xlane.xlu0 %578
        %v580 = vsub.f32 %v576, %v579
        %v581 = vmul.f32 %v580, 1.442695
        %v582 = vpow.pop %v581
        %v583 = vsel %vm334, %v582, 0.0
        %584 = vadd.xlane.f32.xlu0 %v583
        %v585 = vpop.xlane.xlu0 %584
        %v586 = vrcp.pop %v585
        %v587 = vmul.f32 1.0, %v586
        %v588 = vmul.f32 %v582, %v587
        %589 = vrot.lane.b32.xlu0 %v323, 56
        %v590 = vpop.permute.xlu0 %589
        %v593 = vsel %vm334, %v588, 0
        %595 = vmatprep.subr.mxu0 0.0
        %596 = vmatpush1.msra.mxu0 0.0
        %597 = vmatprep.subr.mxu0 0.0
        %598 = vmatpush1.msra.mxu0 0.0
        %599 = vmatprep.subr.mxu0 0.0
        %600 = vmatpush1.msra.mxu0 0.0
        %601 = vmatprep.subr.mxu0 0.0
        %602 = vmatpush1.msra.mxu0 0.0
        %603 = vmatprep.subr.mxu0 0.0
        %604 = vmatpush1.msra.mxu0 0.0
        %605 = vmatprep.subr.mxu0 0.0
        %606 = vmatpush1.msra.mxu0 0.0
        %607 = vmatprep.subr.mxu0 0.0
        %608 = vmatpush1.msra.mxu0 0.0
        %609 = vmatprep.subr.mxu0 0.0
        %610 = vmatpush1.msra.mxu0 0.0
        %611 = vmatprep.subr.mxu0 0.0
        %612 = vmatpush1.msra.mxu0 0.0
        %613 = vmatprep.subr.mxu0 0.0
        %614 = vmatpush1.msra.mxu0 0.0
        %615 = vmatprep.subr.mxu0 0.0
        %616 = vmatpush1.msra.mxu0 0.0
        %617 = vmatprep.subr.mxu0 0.0
        %618 = vmatpush1.msra.mxu0 0.0
        %619 = vmatprep.subr.mxu0 0.0
        %620 = vmatpush1.msra.mxu0 0.0
        %621 = vmatprep.subr.mxu0 0.0
        %622 = vmatpush1.msra.mxu0 0.0
        %623 = vmatprep.subr.mxu0 0.0
        %624 = vmatpush1.msra.mxu0 0.0
        %625 = vmatprep.subr.mxu0 0.0
        %626 = vmatpush1.msra.mxu0 %v590
        %627 = vmatprep.subr.mxu0 0.0
        %628 = vmatpush2.msra.mxu0 0.0
        %629 = vmatprep.subr.mxu0 0.0
        %630 = vmatpush2.msra.mxu0 0.0
        %631 = vmatprep.subr.mxu0 0.0
        %632 = vmatpush2.msra.mxu0 0.0
        %633 = vmatprep.subr.mxu0 0.0
        %634 = vmatpush2.msra.mxu0 0.0
        %635 = vmatprep.subr.mxu0 0.0
        %636 = vmatpush2.msra.mxu0 0.0
        %637 = vmatprep.subr.mxu0 0.0
        %638 = vmatpush2.msra.mxu0 0.0
        %639 = vmatprep.subr.mxu0 0.0
        %640 = vmatpush2.msra.mxu0 0.0
        %641 = vmatprep.subr.mxu0 0.0
        %642 = vmatpush2.msra.mxu0 0.0
        %643 = vmatprep.subr.mxu0 0.0
        %644 = vmatpush2.msra.mxu0 0.0
        %645 = vmatprep.subr.mxu0 0.0
        %646 = vmatpush2.msra.mxu0 0.0
        %647 = vmatprep.subr.mxu0 0.0
        %648 = vmatpush2.msra.mxu0 0.0
        %649 = vmatprep.subr.mxu0 0.0
        %650 = vmatpush2.msra.mxu0 0.0
        %651 = vmatprep.subr.mxu0 0.0
        %652 = vmatpush2.msra.mxu0 0.0
        %653 = vmatprep.subr.mxu0 0.0
        %654 = vmatpush2.msra.mxu0 0.0
        %655 = vmatprep.subr.mxu0 0.0
        %656 = vmatpush2.msra.mxu0 0.0
        %657 = vmatprep.subr.mxu0 0.0
        %658 = vmatpush2.msra.mxu0 0.0
        %659 = vmatprep.mubr.f32.mxu0 0.0
        %660 = vmatmul.mubr.f32.gmra.mxu0 %v593
        %v661 = vpop.f32.mrf.mxu0
        %v662 = vadd.f32 0.0, %v661
        %v663 = vpop.f32.mrf.mxu0
        %664 = vdwg.mxu0
        %665 = vrot.lane.b32.xlu0 %v323, 112
        %v666 = vpop.permute.xlu0 %665
        %667 = vrot.lane.b32.xlu0 %v323, 80
        %v668 = vpop.permute.xlu0 %667
        %v669 = vsel %vm334, %v666, 0
        %v671 = vsel %vm334, %v668, 0
        %673 = vmatprep.subr.mxu0 0.0
        %674 = vmatpush1.xpose.msra.mxu0 0.0
        %675 = vmatprep.subr.mxu0 0.0
        %676 = vmatpush1.xpose.msra.mxu0 0.0
        %677 = vmatprep.subr.mxu0 0.0
        %678 = vmatpush1.xpose.msra.mxu0 0.0
        %679 = vmatprep.subr.mxu0 0.0
        %680 = vmatpush1.xpose.msra.mxu0 0.0
        %681 = vmatprep.subr.mxu0 0.0
        %682 = vmatpush1.xpose.msra.mxu0 0.0
        %683 = vmatprep.subr.mxu0 0.0
        %684 = vmatpush1.xpose.msra.mxu0 0.0
        %685 = vmatprep.subr.mxu0 0.0
        %686 = vmatpush1.xpose.msra.mxu0 0.0
        %687 = vmatprep.subr.mxu0 0.0
        %688 = vmatpush1.xpose.msra.mxu0 0.0
        %689 = vmatprep.subr.mxu0 0.0
        %690 = vmatpush1.xpose.msra.mxu0 0.0
        %691 = vmatprep.subr.mxu0 0.0
        %692 = vmatpush1.xpose.msra.mxu0 0.0
        %693 = vmatprep.subr.mxu0 0.0
        %694 = vmatpush1.xpose.msra.mxu0 0.0
        %695 = vmatprep.subr.mxu0 0.0
        %696 = vmatpush1.xpose.msra.mxu0 0.0
        %697 = vmatprep.subr.mxu0 0.0
        %698 = vmatpush1.xpose.msra.mxu0 0.0
        %699 = vmatprep.subr.mxu0 0.0
        %700 = vmatpush1.xpose.msra.mxu0 0.0
        %701 = vmatprep.subr.mxu0 0.0
        %702 = vmatpush1.xpose.msra.mxu0 0.0
        %703 = vmatprep.subr.mxu0 0.0
        %704 = vmatpush1.xpose.msra.mxu0 %v671
        %705 = vmatprep.subr.mxu0 0.0
        %706 = vmatpush2.xpose.msra.mxu0 0.0
        %707 = vmatprep.subr.mxu0 0.0
        %708 = vmatpush2.xpose.msra.mxu0 0.0
        %709 = vmatprep.subr.mxu0 0.0
        %710 = vmatpush2.xpose.msra.mxu0 0.0
        %711 = vmatprep.subr.mxu0 0.0
        %712 = vmatpush2.xpose.msra.mxu0 0.0
        %713 = vmatprep.subr.mxu0 0.0
        %714 = vmatpush2.xpose.msra.mxu0 0.0
        %715 = vmatprep.subr.mxu0 0.0
        %716 = vmatpush2.xpose.msra.mxu0 0.0
        %717 = vmatprep.subr.mxu0 0.0
        %718 = vmatpush2.xpose.msra.mxu0 0.0
        %719 = vmatprep.subr.mxu0 0.0
        %720 = vmatpush2.xpose.msra.mxu0 0.0
        %721 = vmatprep.subr.mxu0 0.0
        %722 = vmatpush2.xpose.msra.mxu0 0.0
        %723 = vmatprep.subr.mxu0 0.0
        %724 = vmatpush2.xpose.msra.mxu0 0.0
        %725 = vmatprep.subr.mxu0 0.0
        %726 = vmatpush2.xpose.msra.mxu0 0.0
        %727 = vmatprep.subr.mxu0 0.0
        %728 = vmatpush2.xpose.msra.mxu0 0.0
        %729 = vmatprep.subr.mxu0 0.0
        %730 = vmatpush2.xpose.msra.mxu0 0.0
        %731 = vmatprep.subr.mxu0 0.0
        %732 = vmatpush2.xpose.msra.mxu0 0.0
        %733 = vmatprep.subr.mxu0 0.0
        %734 = vmatpush2.xpose.msra.mxu0 0.0
        %735 = vmatprep.subr.mxu0 0.0
        %736 = vmatpush2.xpose.msra.mxu0 0.0
        %737 = vmatprep.mubr.f32.mxu0 0.0
        %738 = vmatmul.mubr.f32.gmra.mxu0 %v669
        %v739 = vpop.f32.mrf.mxu0
        %v740 = vadd.f32 0.0, %v739
        %v741 = vpop.f32.mrf.mxu0
        %742 = vdwg.mxu0
        %v743 = vsel %vm330, %v740, -1e+30
        %v744 = vsel %vm334, %v743, -inf
        %745 = vmax.xlane.f32.xlu0 %v744
        %v746 = vpop.xlane.xlu0 %745
        %v747 = vsub.f32 %v743, %v746
        %v748 = vmul.f32 %v747, 1.442695
        %v749 = vpow.pop %v748
        %v750 = vsel %vm334, %v749, 0.0
        %751 = vadd.xlane.f32.xlu0 %v750
        %v752 = vpop.xlane.xlu0 %751
        %v753 = vrcp.pop %v752
        %v754 = vmul.f32 1.0, %v753
        %v755 = vmul.f32 %v749, %v754
        %756 = vrot.lane.b32.xlu0 %v323, 48
        %v757 = vpop.permute.xlu0 %756
        %v760 = vsel %vm334, %v755, 0
        %762 = vmatprep.subr.mxu0 0.0
        %763 = vmatpush1.msra.mxu0 0.0
        %764 = vmatprep.subr.mxu0 0.0
        %765 = vmatpush1.msra.mxu0 0.0
        %766 = vmatprep.subr.mxu0 0.0
        %767 = vmatpush1.msra.mxu0 0.0
        %768 = vmatprep.subr.mxu0 0.0
        %769 = vmatpush1.msra.mxu0 0.0
        %770 = vmatprep.subr.mxu0 0.0
        %771 = vmatpush1.msra.mxu0 0.0
        %772 = vmatprep.subr.mxu0 0.0
        %773 = vmatpush1.msra.mxu0 0.0
        %774 = vmatprep.subr.mxu0 0.0
        %775 = vmatpush1.msra.mxu0 0.0
        %776 = vmatprep.subr.mxu0 0.0
        %777 = vmatpush1.msra.mxu0 0.0
        %778 = vmatprep.subr.mxu0 0.0
        %779 = vmatpush1.msra.mxu0 0.0
        %780 = vmatprep.subr.mxu0 0.0
        %781 = vmatpush1.msra.mxu0 0.0
        %782 = vmatprep.subr.mxu0 0.0
        %783 = vmatpush1.msra.mxu0 0.0
        %784 = vmatprep.subr.mxu0 0.0
        %785 = vmatpush1.msra.mxu0 0.0
        %786 = vmatprep.subr.mxu0 0.0
        %787 = vmatpush1.msra.mxu0 0.0
        %788 = vmatprep.subr.mxu0 0.0
        %789 = vmatpush1.msra.mxu0 0.0
        %790 = vmatprep.subr.mxu0 0.0
        %791 = vmatpush1.msra.mxu0 0.0
        %792 = vmatprep.subr.mxu0 0.0
        %793 = vmatpush1.msra.mxu0 %v757
        %794 = vmatprep.subr.mxu0 0.0
        %795 = vmatpush2.msra.mxu0 0.0
        %796 = vmatprep.subr.mxu0 0.0
        %797 = vmatpush2.msra.mxu0 0.0
        %798 = vmatprep.subr.mxu0 0.0
        %799 = vmatpush2.msra.mxu0 0.0
        %800 = vmatprep.subr.mxu0 0.0
        %801 = vmatpush2.msra.mxu0 0.0
        %802 = vmatprep.subr.mxu0 0.0
        %803 = vmatpush2.msra.mxu0 0.0
        %804 = vmatprep.subr.mxu0 0.0
        %805 = vmatpush2.msra.mxu0 0.0
        %806 = vmatprep.subr.mxu0 0.0
        %807 = vmatpush2.msra.mxu0 0.0
        %808 = vmatprep.subr.mxu0 0.0
        %809 = vmatpush2.msra.mxu0 0.0
        %810 = vmatprep.subr.mxu0 0.0
        %811 = vmatpush2.msra.mxu0 0.0
        %812 = vmatprep.subr.mxu0 0.0
        %813 = vmatpush2.msra.mxu0 0.0
        %814 = vmatprep.subr.mxu0 0.0
        %815 = vmatpush2.msra.mxu0 0.0
        %816 = vmatprep.subr.mxu0 0.0
        %817 = vmatpush2.msra.mxu0 0.0
        %818 = vmatprep.subr.mxu0 0.0
        %819 = vmatpush2.msra.mxu0 0.0
        %820 = vmatprep.subr.mxu0 0.0
        %821 = vmatpush2.msra.mxu0 0.0
        %822 = vmatprep.subr.mxu0 0.0
        %823 = vmatpush2.msra.mxu0 0.0
        %824 = vmatprep.subr.mxu0 0.0
        %825 = vmatpush2.msra.mxu0 0.0
        %826 = vmatprep.mubr.f32.mxu0 0.0
        %827 = vmatmul.mubr.f32.gmra.mxu0 %v760
        %v828 = vpop.f32.mrf.mxu0
        %v829 = vadd.f32 0.0, %v828
        %v830 = vpop.f32.mrf.mxu0
        %831 = vdwg.mxu0
        %832 = vrot.lane.b32.xlu0 %v323, 104
        %v833 = vpop.permute.xlu0 %832
        %834 = vrot.lane.b32.xlu0 %v323, 72
        %v835 = vpop.permute.xlu0 %834
        %v836 = vsel %vm334, %v833, 0
        %v838 = vsel %vm334, %v835, 0
        %840 = vmatprep.subr.mxu0 0.0
        %841 = vmatpush1.xpose.msra.mxu0 0.0
        %842 = vmatprep.subr.mxu0 0.0
        %843 = vmatpush1.xpose.msra.mxu0 0.0
        %844 = vmatprep.subr.mxu0 0.0
        %845 = vmatpush1.xpose.msra.mxu0 0.0
        %846 = vmatprep.subr.mxu0 0.0
        %847 = vmatpush1.xpose.msra.mxu0 0.0
        %848 = vmatprep.subr.mxu0 0.0
        %849 = vmatpush1.xpose.msra.mxu0 0.0
        %850 = vmatprep.subr.mxu0 0.0
        %851 = vmatpush1.xpose.msra.mxu0 0.0
        %852 = vmatprep.subr.mxu0 0.0
        %853 = vmatpush1.xpose.msra.mxu0 0.0
        %854 = vmatprep.subr.mxu0 0.0
        %855 = vmatpush1.xpose.msra.mxu0 0.0
        %856 = vmatprep.subr.mxu0 0.0
        %857 = vmatpush1.xpose.msra.mxu0 0.0
        %858 = vmatprep.subr.mxu0 0.0
        %859 = vmatpush1.xpose.msra.mxu0 0.0
        %860 = vmatprep.subr.mxu0 0.0
        %861 = vmatpush1.xpose.msra.mxu0 0.0
        %862 = vmatprep.subr.mxu0 0.0
        %863 = vmatpush1.xpose.msra.mxu0 0.0
        %864 = vmatprep.subr.mxu0 0.0
        %865 = vmatpush1.xpose.msra.mxu0 0.0
        %866 = vmatprep.subr.mxu0 0.0
        %867 = vmatpush1.xpose.msra.mxu0 0.0
        %868 = vmatprep.subr.mxu0 0.0
        %869 = vmatpush1.xpose.msra.mxu0 0.0
        %870 = vmatprep.subr.mxu0 0.0
        %871 = vmatpush1.xpose.msra.mxu0 %v838
        %872 = vmatprep.subr.mxu0 0.0
        %873 = vmatpush2.xpose.msra.mxu0 0.0
        %874 = vmatprep.subr.mxu0 0.0
        %875 = vmatpush2.xpose.msra.mxu0 0.0
        %876 = vmatprep.subr.mxu0 0.0
        %877 = vmatpush2.xpose.msra.mxu0 0.0
        %878 = vmatprep.subr.mxu0 0.0
        %879 = vmatpush2.xpose.msra.mxu0 0.0
        %880 = vmatprep.subr.mxu0 0.0
        %881 = vmatpush2.xpose.msra.mxu0 0.0
        %882 = vmatprep.subr.mxu0 0.0
        %883 = vmatpush2.xpose.msra.mxu0 0.0
        %884 = vmatprep.subr.mxu0 0.0
        %885 = vmatpush2.xpose.msra.mxu0 0.0
        %886 = vmatprep.subr.mxu0 0.0
        %887 = vmatpush2.xpose.msra.mxu0 0.0
        %888 = vmatprep.subr.mxu0 0.0
        %889 = vmatpush2.xpose.msra.mxu0 0.0
        %890 = vmatprep.subr.mxu0 0.0
        %891 = vmatpush2.xpose.msra.mxu0 0.0
        %892 = vmatprep.subr.mxu0 0.0
        %893 = vmatpush2.xpose.msra.mxu0 0.0
        %894 = vmatprep.subr.mxu0 0.0
        %895 = vmatpush2.xpose.msra.mxu0 0.0
        %896 = vmatprep.subr.mxu0 0.0
        %897 = vmatpush2.xpose.msra.mxu0 0.0
        %898 = vmatprep.subr.mxu0 0.0
        %899 = vmatpush2.xpose.msra.mxu0 0.0
        %900 = vmatprep.subr.mxu0 0.0
        %901 = vmatpush2.xpose.msra.mxu0 0.0
        %902 = vmatprep.subr.mxu0 0.0
        %903 = vmatpush2.xpose.msra.mxu0 0.0
        %904 = vmatprep.mubr.f32.mxu0 0.0
        %905 = vmatmul.mubr.f32.gmra.mxu0 %v836
        %v906 = vpop.f32.mrf.mxu0
        %v907 = vadd.f32 0.0, %v906
        %v908 = vpop.f32.mrf.mxu0
        %909 = vdwg.mxu0
        %v910 = vsel %vm330, %v907, -1e+30
        %v911 = vsel %vm334, %v910, -inf
        %912 = vmax.xlane.f32.xlu0 %v911
        %v913 = vpop.xlane.xlu0 %912
        %v914 = vsub.f32 %v910, %v913
        %v915 = vmul.f32 %v914, 1.442695
        %v916 = vpow.pop %v915
        %v917 = vsel %vm334, %v916, 0.0
        %918 = vadd.xlane.f32.xlu0 %v917
        %v919 = vpop.xlane.xlu0 %918
        %v920 = vrcp.pop %v919
        %v921 = vmul.f32 1.0, %v920
        %v922 = vmul.f32 %v916, %v921
        %923 = vrot.lane.b32.xlu0 %v323, 40
        %v924 = vpop.permute.xlu0 %923
        %v927 = vsel %vm334, %v922, 0
        %929 = vmatprep.subr.mxu0 0.0
        %930 = vmatpush1.msra.mxu0 0.0
        %931 = vmatprep.subr.mxu0 0.0
        %932 = vmatpush1.msra.mxu0 0.0
        %933 = vmatprep.subr.mxu0 0.0
        %934 = vmatpush1.msra.mxu0 0.0
        %935 = vmatprep.subr.mxu0 0.0
        %936 = vmatpush1.msra.mxu0 0.0
        %937 = vmatprep.subr.mxu0 0.0
        %938 = vmatpush1.msra.mxu0 0.0
        %939 = vmatprep.subr.mxu0 0.0
        %940 = vmatpush1.msra.mxu0 0.0
        %941 = vmatprep.subr.mxu0 0.0
        %942 = vmatpush1.msra.mxu0 0.0
        %943 = vmatprep.subr.mxu0 0.0
        %944 = vmatpush1.msra.mxu0 0.0
        %945 = vmatprep.subr.mxu0 0.0
        %946 = vmatpush1.msra.mxu0 0.0
        %947 = vmatprep.subr.mxu0 0.0
        %948 = vmatpush1.msra.mxu0 0.0
        %949 = vmatprep.subr.mxu0 0.0
        %950 = vmatpush1.msra.mxu0 0.0
        %951 = vmatprep.subr.mxu0 0.0
        %952 = vmatpush1.msra.mxu0 0.0
        %953 = vmatprep.subr.mxu0 0.0
        %954 = vmatpush1.msra.mxu0 0.0
        %955 = vmatprep.subr.mxu0 0.0
        %956 = vmatpush1.msra.mxu0 0.0
        %957 = vmatprep.subr.mxu0 0.0
        %958 = vmatpush1.msra.mxu0 0.0
        %959 = vmatprep.subr.mxu0 0.0
        %960 = vmatpush1.msra.mxu0 %v924
        %961 = vmatprep.subr.mxu0 0.0
        %962 = vmatpush2.msra.mxu0 0.0
        %963 = vmatprep.subr.mxu0 0.0
        %964 = vmatpush2.msra.mxu0 0.0
        %965 = vmatprep.subr.mxu0 0.0
        %966 = vmatpush2.msra.mxu0 0.0
        %967 = vmatprep.subr.mxu0 0.0
        %968 = vmatpush2.msra.mxu0 0.0
        %969 = vmatprep.subr.mxu0 0.0
        %970 = vmatpush2.msra.mxu0 0.0
        %971 = vmatprep.subr.mxu0 0.0
        %972 = vmatpush2.msra.mxu0 0.0
        %973 = vmatprep.subr.mxu0 0.0
        %974 = vmatpush2.msra.mxu0 0.0
        %975 = vmatprep.subr.mxu0 0.0
        %976 = vmatpush2.msra.mxu0 0.0
        %977 = vmatprep.subr.mxu0 0.0
        %978 = vmatpush2.msra.mxu0 0.0
        %979 = vmatprep.subr.mxu0 0.0
        %980 = vmatpush2.msra.mxu0 0.0
        %981 = vmatprep.subr.mxu0 0.0
        %982 = vmatpush2.msra.mxu0 0.0
        %983 = vmatprep.subr.mxu0 0.0
        %984 = vmatpush2.msra.mxu0 0.0
        %985 = vmatprep.subr.mxu0 0.0
        %986 = vmatpush2.msra.mxu0 0.0
        %987 = vmatprep.subr.mxu0 0.0
        %988 = vmatpush2.msra.mxu0 0.0
        %989 = vmatprep.subr.mxu0 0.0
        %990 = vmatpush2.msra.mxu0 0.0
        %991 = vmatprep.subr.mxu0 0.0
        %992 = vmatpush2.msra.mxu0 0.0
        %993 = vmatprep.mubr.f32.mxu0 0.0
        %994 = vmatmul.mubr.f32.gmra.mxu0 %v927
        %v995 = vpop.f32.mrf.mxu0
        %v996 = vadd.f32 0.0, %v995
        %v997 = vpop.f32.mrf.mxu0
        %998 = vdwg.mxu0
        %1000 = vrot.lane.b32.xlu0 %v662, 8
        %v1001 = vpop.permute.xlu0 %1000
        %1004 = vrot.lane.b32.xlu0 %v829, 16
        %v1005 = vpop.permute.xlu0 %1004
        %1008 = vrot.lane.b32.xlu0 %v996, 24
        %v1009 = vpop.permute.xlu0 %1008
        %v1011 = vsel %vm334, %v495, %v1001
        %vm1012 = vcmask 130048
        %v1013 = vsel %vm1012, %v1011, %v1005
        %vm1014 = vcmask 195584
        %v1015 = vsel %vm1014, %v1013, %v1009
        %v1017 = vlaneseq
        %v1018 = vshrl.u32 %v1017, 7
        %v1019 = vsub.s32 0, %v1018
        %v1020 = vrot.slane %v251, %v1019
        %v1023 = vsel %vm252, %v1015, 0
        %1025 = vmatprep.subr.mxu0 0.0
        %1026 = vmatpush1.msra.mxu0 0.0
        %1027 = vmatprep.subr.mxu0 0.0
        %1028 = vmatpush1.msra.mxu0 0.0
        %1029 = vmatprep.subr.mxu0 0.0
        %1030 = vmatpush1.msra.mxu0 0.0
        %1031 = vmatprep.subr.mxu0 0.0
        %1032 = vmatpush1.msra.mxu0 0.0
        %1033 = vmatprep.subr.mxu0 0.0
        %1034 = vmatpush1.msra.mxu0 0.0
        %1035 = vmatprep.subr.mxu0 0.0
        %1036 = vmatpush1.msra.mxu0 0.0
        %1037 = vmatprep.subr.mxu0 0.0
        %1038 = vmatpush1.msra.mxu0 0.0
        %1039 = vmatprep.subr.mxu0 0.0
        %1040 = vmatpush1.msra.mxu0 0.0
        %1041 = vmatprep.subr.mxu0 0.0
        %1042 = vmatpush1.msra.mxu0 0.0
        %1043 = vmatprep.subr.mxu0 0.0
        %1044 = vmatpush1.msra.mxu0 0.0
        %1045 = vmatprep.subr.mxu0 0.0
        %1046 = vmatpush1.msra.mxu0 0.0
        %1047 = vmatprep.subr.mxu0 0.0
        %1048 = vmatpush1.msra.mxu0 0.0
        %1049 = vmatprep.subr.mxu0 0.0
        %1050 = vmatpush1.msra.mxu0 %v250
        %1051 = vmatprep.subr.mxu0 0.0
        %1052 = vmatpush1.msra.mxu0 %v249
        %1053 = vmatprep.subr.mxu0 0.0
        %1054 = vmatpush1.msra.mxu0 %v248
        %1055 = vmatprep.subr.mxu0 0.0
        %1056 = vmatpush1.msra.mxu0 %v247
        %1057 = vmatprep.subr.mxu0 0.0
        %1058 = vmatpush2.msra.mxu0 0.0
        %1059 = vmatprep.subr.mxu0 0.0
        %1060 = vmatpush2.msra.mxu0 0.0
        %1061 = vmatprep.subr.mxu0 0.0
        %1062 = vmatpush2.msra.mxu0 0.0
        %1063 = vmatprep.subr.mxu0 0.0
        %1064 = vmatpush2.msra.mxu0 0.0
        %1065 = vmatprep.subr.mxu0 0.0
        %1066 = vmatpush2.msra.mxu0 0.0
        %1067 = vmatprep.subr.mxu0 0.0
        %1068 = vmatpush2.msra.mxu0 0.0
        %1069 = vmatprep.subr.mxu0 0.0
        %1070 = vmatpush2.msra.mxu0 0.0
        %1071 = vmatprep.subr.mxu0 0.0
        %1072 = vmatpush2.msra.mxu0 0.0
        %1073 = vmatprep.subr.mxu0 0.0
        %1074 = vmatpush2.msra.mxu0 0.0
        %1075 = vmatprep.subr.mxu0 0.0
        %1076 = vmatpush2.msra.mxu0 0.0
        %1077 = vmatprep.subr.mxu0 0.0
        %1078 = vmatpush2.msra.mxu0 0.0
        %1079 = vmatprep.subr.mxu0 0.0
        %1080 = vmatpush2.msra.mxu0 0.0
        %1081 = vmatprep.subr.mxu0 0.0
        %1082 = vmatpush2.msra.mxu0 0.0
        %1083 = vmatprep.subr.mxu0 0.0
        %1084 = vmatpush2.msra.mxu0 0.0
        %1085 = vmatprep.subr.mxu0 0.0
        %1086 = vmatpush2.msra.mxu0 0.0
        %1087 = vmatprep.subr.mxu0 0.0
        %1088 = vmatpush2.msra.mxu0 0.0
        %1089 = vmatprep.mubr.f32.mxu0 0.0
        %1090 = vmatmul.mubr.f32.gmra.mxu0 %v1023
        %v1091 = vpop.f32.mrf.mxu0
        %v1092 = vadd.f32 %v1020, %v1091
        %v1093 = vpop.f32.mrf.mxu0
        %1094 = vdwg.mxu0
        %1095 = vst.msk [vmem:[%s241] sm:$0xff] %vm252, %v1092
        %s1096 = sand.u32 %s119, 1
        %s1097 = scalar_lea.sflag [#allocation4], %s1096
        %s1098 = sand.u32 %s119, 1
        %s1099 = smul.addr %s1098, 8
        %s1100 = scalar_lea.vmem [#allocation8], %s1099
        // Predicated region
        $region49: #{tpu_custom_call.1} parent=35 // pred_check
          %p1101 = pneg %p129
        $region50: #{tpu_custom_call.1} parent=35 // pred_check_branch
          %1103 = sbr.rel (%p1101) target = $region52
        $region51: #{tpu_custom_call.1} parent=35 // pred_region
          %s1105 = ssub.s32 128, 128
          %1106 = vsyncadd %s1097, %s1105
          %s1107 = smul.addr %s22, 128
          %s1108 = scalar_lea.hbm %s4, %s1107
          %s1110 = sshll.u32 %s1100, 4
          %s1111 = int_to_ptr.vmem [resolvable:$true] %s1110
          %1113 = dma.vmem_to_hbm [thread:$0]  %s1111, 128, %s1108, %s1097
        $region52: #{tpu_custom_call.1} parent=35 // pred_fallthru
          _
      $region36: #{tpu_custom_call.1} parent=5 // pred_fallthru
        _
      %p1114 = scmp.le.s32.totalorder 2, %s17
      // Predicated region
      $region53: #{tpu_custom_call.1} parent=5 // pred_check
        %p1115 = pneg %p1114
      $region54: #{tpu_custom_call.1} parent=5 // pred_check_branch
        %1117 = sbr.rel (%p1115) target = $region56
      $region55: #{tpu_custom_call.1} parent=5 // pred_region
        %s1118 = ssub.s32 %s17, 2
        // Predicated region
        $region57: #{tpu_custom_call.1} parent=55 // pred_check
          %p1119 = pneg %p135
        $region58: #{tpu_custom_call.1} parent=55 // pred_check_branch
          %1121 = sbr.rel (%p1119) target = $region60
        $region59: #{tpu_custom_call.1} parent=55 // pred_region
          %s1122 = sand.u32 %s120, 1
          %s1123 = scalar_lea.sflag [#allocation4], %s1122
          %s1124 = sand.u32 %s120, 1
          %s1125 = smul.addr %s1124, 8
          %s1126 = scalar_lea.vmem [#allocation8], %s1125
          %1127 = dma.done %s1123, 128
        $region60: #{tpu_custom_call.1} parent=55 // pred_fallthru
          _
      $region56: #{tpu_custom_call.1} parent=5 // pred_fallthru
        _
    $region6: #{tpu_custom_call.1} parent=1 // loop_footer
      %s21 = sadd.s32 1, %s17
    $region7: #{tpu_custom_call.1} parent=1 // loop_footer_branch
      %16 = sbr.rel target = $region3
    $region8: #{tpu_custom_call.1} parent=1 // loop_exit
      _
    %1128 = vsyncpa [#allocation3], 1
    %s1129 = scalar_lea.sflag [#allocation3], 1
    %1130 = vsyncpa %s1129, 1
    %1131 = vsyncpa [#allocation6], 1
    %1132 = vsyncpa [#allocation4], 1
    %s1133 = scalar_lea.sflag [#allocation4], 1
    %1134 = vsyncpa %s1133, 1

</llo_original>
